<compile_context>
chip_gen: v7x
topology: tpu7x:2x2x1
jax: 0.10.0
libtpu: 0.0.40
codegen_flags: <defaults>
</compile_context>

<pallas_src>
import math
import functools

import jax
import jax.numpy as jnp
from jax import lax
from jax.experimental import pallas as pl
from jax.experimental.pallas import tpu as pltpu


# --------------------------------------------------------------------------------------
# tiling helpers
# --------------------------------------------------------------------------------------
def _pick_block(dim, candidates):
    """First candidate that evenly divides `dim`, else the full dim (always a divisor)."""
    for c in candidates:
        if dim % c == 0:
            return c
    return dim


def _pick_group_size(num_heads, head_dim):
    """Smallest divisor of num_heads whose lane width (G*head_dim) is a multiple of 128
    (unmasked vst / aligned DMA); fall back to all heads (full-H block)."""
    for g in range(1, num_heads + 1):
        if num_heads % g == 0 and (g * head_dim) % 128 == 0:
            return g
    return num_heads


# --------------------------------------------------------------------------------------
# Kernel 1: fused QKV projection   qkv[c] = x @ W[c] + b[c]   (query columns pre-scaled)
# --------------------------------------------------------------------------------------
def _qkv_proj_kernel(x_ref, w_ref, b_ref, o_ref):
    # x_ref: (1, tm, H) bf16 ; w_ref: (1, H, tn) bf16 ; b_ref: (1, 1, tn) f32
    # o_ref: (1, 1, tm, tn) bf16
    acc = lax.dot_general(x_ref[0], w_ref[0], (((1,), (0,)), ((), ())),
                          preferred_element_type=jnp.float32)        # (tm, tn) f32
    o_ref[0, 0] = (acc + b_ref[0]).astype(o_ref.dtype)


def _qkv_projection(x_bf16, w3, b3, *, tm, tn):
    B, S, H = x_bf16.shape
    return pl.pallas_call(
        _qkv_proj_kernel,
        out_shape=jax.ShapeDtypeStruct((3, B, S, H), jnp.bfloat16),
        grid=(3, B, S // tm, H // tn),
        in_specs=[
            pl.BlockSpec((1, tm, H), lambda c, b, i, j: (b, i, 0)),   # activations
            pl.BlockSpec((1, H, tn), lambda c, b, i, j: (c, 0, j)),   # weight column tile
            pl.BlockSpec((1, 1, tn), lambda c, b, i, j: (c, 0, j)),   # bias column tile
        ],
        out_specs=pl.BlockSpec((1, 1, tm, tn), lambda c, b, i, j: (c, b, i, j)),
        compiler_params=pltpu.CompilerParams(
            dimension_semantics=("parallel", "parallel", "parallel", "parallel"),
            vmem_limit_bytes=40 * 1024 * 1024,
        ),
    )(x_bf16, w3, b3)


# --------------------------------------------------------------------------------------
# Kernel 2: per-(batch, head-group) attention with q-row-tiled softmax
# --------------------------------------------------------------------------------------
def _attention_kernel(q_ref, k_ref, v_ref, mask_ref, o_ref,
                      *, group_heads, head_dim, q_block):
    # q_ref/k_ref/v_ref: (1, 1, S, G*hd) bf16 ; mask_ref: (1, 1, 1, S) f32
    # o_ref: (1, S, G*hd) output dtype
    S = q_ref.shape[2]
    mask_row = mask_ref[0, 0]                     # (1, S) f32, broadcasts over query rows
    k = k_ref[0, 0]                               # (S, G*hd) bf16
    v = v_ref[0, 0]                               # (S, G*hd) bf16

    for qb in range(S // q_block):                # static unroll: q-row tiling
        q_lo = qb * q_block
        q_blk = q_ref[0, 0, q_lo:q_lo + q_block, :]       # (q_block, G*hd) bf16 (pre-scaled q)
        ctx_parts = []
        for hh in range(group_heads):             # static unroll: heads in this group
            lo = hh * head_dim
            qh = q_blk[:, lo:lo + head_dim]
            kh = k[:, lo:lo + head_dim]
            vh = v[:, lo:lo + head_dim]
            # q @ k^T without materializing a transpose: contract last dims of both.
            s = lax.dot_general(qh, kh, (((1,), (1,)), ((), ())),
                                preferred_element_type=jnp.float32)   # (q_block, S) f32
            s = s + mask_row
            s = s - jnp.max(s, axis=-1, keepdims=True)
            p = jnp.exp(s)
            probs = p * pl.reciprocal(jnp.sum(p, axis=-1, keepdims=True), approx=True)
            # TODO(synk): attention-probability dropout omitted (inference path).
            ctx_parts.append(jnp.dot(probs.astype(jnp.bfloat16), vh,
                                     preferred_element_type=jnp.float32))  # (q_block, hd)
        ctx = ctx_parts[0] if group_heads == 1 else jnp.concatenate(ctx_parts, axis=-1)
        # Single lane-dense store per (q-block, head-group): width G*hd (multiple of 128 or H).
        o_ref[0, q_lo:q_lo + q_block, :] = ctx.astype(o_ref.dtype)


def _attention(qkv3, mask, out_dtype, *, num_heads, head_dim, group_heads, q_block):
    _, B, S, H = qkv3.shape
    n_groups = num_heads // group_heads
    gw = group_heads * head_dim
    kernel = functools.partial(_attention_kernel, group_heads=group_heads,
                               head_dim=head_dim, q_block=q_block)
    return pl.pallas_call(
        kernel,
        out_shape=jax.ShapeDtypeStruct((B, S, H), out_dtype),
        grid=(B, n_groups),
        in_specs=[
            pl.BlockSpec((1, 1, S, gw), lambda b, g: (0, b, 0, g)),   # q group slice
            pl.BlockSpec((1, 1, S, gw), lambda b, g: (1, b, 0, g)),   # k group slice
            pl.BlockSpec((1, 1, S, gw), lambda b, g: (2, b, 0, g)),   # v group slice
            pl.BlockSpec((1, 1, 1, S), lambda b, g: (b, 0, 0, 0)),    # additive mask
        ],
        out_specs=pl.BlockSpec((1, S, gw), lambda b, g: (b, 0, g)),   # per-step output block
        compiler_params=pltpu.CompilerParams(
            dimension_semantics=("parallel", "parallel"),
            vmem_limit_bytes=40 * 1024 * 1024,
        ),
    )(qkv3, qkv3, qkv3, mask)


# --------------------------------------------------------------------------------------
# Public wrapper
# --------------------------------------------------------------------------------------
def bert_self_attention(hidden_states, attention_mask, w_qkv, b_qkv, *, num_heads):
    """hidden_states: [B, S, H], attention_mask: [B, 1, 1, S],
       w_qkv: [3H, H] (PyTorch Linear layout), b_qkv: [3H]. Returns [B, S, H]."""
    B, S, H = hidden_states.shape
    assert H % num_heads == 0
    head_dim = H // num_heads

    # One-time parameter prep (would be cached at model-init in a real model):
    #   * [3H, H] weight -> (3, H, H) "x @ W" layout (no in-kernel transpose),
    #   * 1/sqrt(head_dim) folded into the query weight/bias (equivalent to the torch
    #     reference's (q/nf) @ (k/nf)^T with nf = head_dim ** 0.25),
    #   * bf16 MXU operands; bias / mask stay f32.
    scale = 1.0 / math.sqrt(head_dim)
    w3 = jnp.asarray(w_qkv, jnp.float32).reshape(3, H, H).transpose(0, 2, 1)
    w3 = w3.at[0].multiply(scale).astype(jnp.bfloat16)                 # (3, H, H) bf16
    b3 = jnp.asarray(b_qkv, jnp.float32).reshape(3, 1, H)
    b3 = b3.at[0].multiply(scale)                                      # (3, 1, H) f32

    x_bf16 = hidden_states.astype(jnp.bfloat16)
    mask = attention_mask.astype(jnp.float32)

    # Tiling knobs (all divisors of the relevant dims; fall back to full dim at small shapes).
    tm = _pick_block(S, (256, 128))                 # projection sequence tile
    tn = _pick_block(H, (512, 256, 128))            # projection output-column tile
    group_heads = _pick_group_size(num_heads, head_dim)
    q_block = _pick_block(S, (128, 256))            # softmax query-row tile

    qkv3 = _qkv_projection(x_bf16, w3, b3, tm=tm, tn=tn)               # (3, B, S, H) bf16
    return _attention(qkv3, mask, hidden_states.dtype,
                      num_heads=num_heads, head_dim=head_dim,
                      group_heads=group_heads, q_block=q_block)


# --------------------------------------------------------------------------------------
# Pure-JAX reference (mirrors the PyTorch forward) + self-test
# --------------------------------------------------------------------------------------
def _reference(hidden_states, attention_mask, w_qkv, b_qkv, *, num_heads):
    B, S, H = hidden_states.shape
    hn = H // num_heads
    qkv = jnp.einsum('bsh,oh->bso', hidden_states, w_qkv) + b_qkv
    q, k, v = jnp.split(qkv, 3, axis=-1)

    def heads(t):  # [B, S, H] -> [B, n, S, hn]
        return t.reshape(B, S, num_heads, hn).transpose(0, 2, 1, 3)

    q, k, v = heads(q), heads(k), heads(v)
    nf = math.sqrt(math.sqrt(hn))
    scores = jnp.einsum('bnqd,bnkd->bnqk', q / nf, k / nf) + attention_mask
    probs = jax.nn.softmax(scores, axis=-1)
    ctx = jnp.einsum('bnqk,bnkd->bnqd', probs, v)
    return ctx.transpose(0, 2, 1, 3).reshape(B, S, H)


if __name__ == "__main__":
    B, S, H, N_HEADS = 2, 8, 32, 4
    key = jax.random.PRNGKey(0)
    k1, k2, k3, k4 = jax.random.split(key, 4)

    hidden_states = jax.random.normal(k1, (B, S, H), dtype=jnp.float32)
    # Standard BERT additive mask: 0 for attended positions, -10000 for masked.
    mask_bits = (jax.random.uniform(k2, (B, 1, 1, S)) > 0.2).astype(jnp.float32)
    attention_mask = (1.0 - mask_bits) * -10000.0

    w_qkv = jax.random.normal(k3, (3 * H, H), dtype=jnp.float32) * 0.02
    b_qkv = jax.random.normal(k4, (3 * H,), dtype=jnp.float32) * 0.02

    out = bert_self_attention(hidden_states, attention_mask, w_qkv, b_qkv,
                              num_heads=N_HEADS)
    out = jax.block_until_ready(out)

    ref = _reference(hidden_states, attention_mask, w_qkv, b_qkv, num_heads=N_HEADS)
    assert out.shape == (B, S, H)
    # bf16 MXU inputs (f32 accumulation) + approx reciprocal vs. f32 reference.
    assert jnp.allclose(out, ref, atol=2e-2, rtol=2e-2), "mismatch vs reference"

    print("KERNEL_OK")
</pallas_src>

<mosaic_0001>
module attributes {stable_mosaic.version = 11 : i64} {
  func.func @_qkv_proj_kernel(%arg0: i32, %arg1: i32, %arg2: i32, %arg3: i32, %arg4: memref<1x8x32xbf16, #tpu.memory_space<vmem>>, %arg5: memref<1x32x32xbf16, #tpu.memory_space<vmem>>, %arg6: memref<1x1x32xf32, #tpu.memory_space<vmem>>, %arg7: memref<1x1x8x32xbf16, #tpu.memory_space<vmem>>) attributes {dimension_semantics = [#tpu.dimension_semantics<parallel>, #tpu.dimension_semantics<parallel>, #tpu.dimension_semantics<parallel>, #tpu.dimension_semantics<parallel>], iteration_bounds = array<i64: 3, 2, 1, 1>, scalar_prefetch = 0 : i64, scratch_operands = 0 : i64, tpu.core_type = #tpu.core_type<tc>, window_params = [{transform_indices = @transform_0, window_bounds = array<i64: 1, 8, 32>}, {transform_indices = @transform_1, window_bounds = array<i64: 1, 32, 32>}, {transform_indices = @transform_2, window_bounds = array<i64: 1, 1, 32>}, {transform_indices = @transform_3, window_bounds = array<i64: 1, 1, 8, 32>}]} {
    %c0 = arith.constant 0 : index
    %c0_0 = arith.constant 0 : index
    %c0_1 = arith.constant 0 : index
    %0 = vector.load %arg4[%c0, %c0_0, %c0_1] : memref<1x8x32xbf16, #tpu.memory_space<vmem>>, vector<1x8x32xbf16>
    %1 = vector.shape_cast %0 : vector<1x8x32xbf16> to vector<8x32xbf16>
    %c0_2 = arith.constant 0 : index
    %c0_3 = arith.constant 0 : index
    %c0_4 = arith.constant 0 : index
    %2 = vector.load %arg5[%c0_2, %c0_3, %c0_4] : memref<1x32x32xbf16, #tpu.memory_space<vmem>>, vector<1x32x32xbf16>
    %3 = vector.shape_cast %2 : vector<1x32x32xbf16> to vector<32x32xbf16>
    %cst = arith.constant dense<0.000000e+00> : vector<8x32xf32>
    %4 = tpu.matmul %1, %3, %cst {dimension_numbers = #tpu.dot_dimension_numbers<[1], [0], [0], [1], [0, 0, 1, 1], [], []>} : vector<8x32xbf16>, vector<32x32xbf16>, vector<8x32xf32> -> vector<8x32xf32>
    %c0_5 = arith.constant 0 : index
    %c0_6 = arith.constant 0 : index
    %c0_7 = arith.constant 0 : index
    %5 = vector.load %arg6[%c0_5, %c0_6, %c0_7] : memref<1x1x32xf32, #tpu.memory_space<vmem>>, vector<1x1x32xf32>
    %6 = vector.shape_cast %5 : vector<1x1x32xf32> to vector<1x32xf32>
    %7 = vector.broadcast %6 : vector<1x32xf32> to vector<8x32xf32>
    %8 = arith.addf %4, %7 : vector<8x32xf32>
    %9 = arith.truncf %8 : vector<8x32xf32> to vector<8x32xbf16>
    %c0_8 = arith.constant 0 : index
    %c0_9 = arith.constant 0 : index
    %c0_10 = arith.constant 0 : index
    %c0_11 = arith.constant 0 : index
    %10 = vector.load %arg7[%c0_8, %c0_9, %c0_10, %c0_11] : memref<1x1x8x32xbf16, #tpu.memory_space<vmem>>, vector<1x1x8x32xbf16>
    %11 = vector.shape_cast %10 : vector<1x1x8x32xbf16> to vector<8x32xbf16>
    %12 = vector.shape_cast %9 : vector<8x32xbf16> to vector<1x1x8x32xbf16>
    tpu.vector_store %arg7[%c0_8, %c0_9, %c0_10, %c0_11], %12 {strides = array<i32>} : memref<1x1x8x32xbf16, #tpu.memory_space<vmem>>, vector<1x1x8x32xbf16>,
    return
  }
  func.func @transform_0(%arg0: i32, %arg1: i32, %arg2: i32, %arg3: i32) -> (i32, i32, i32) {
    %c0_i32 = arith.constant 0 : i32
    %c0_i32_0 = arith.constant 0 : i32
    return %arg1, %arg2, %c0_i32 : i32, i32, i32
  }
  func.func @transform_1(%arg0: i32, %arg1: i32, %arg2: i32, %arg3: i32) -> (i32, i32, i32) {
    %c0_i32 = arith.constant 0 : i32
    %c0_i32_0 = arith.constant 0 : i32
    return %arg0, %c0_i32, %arg3 : i32, i32, i32
  }
  func.func @transform_2(%arg0: i32, %arg1: i32, %arg2: i32, %arg3: i32) -> (i32, i32, i32) {
    %c0_i32 = arith.constant 0 : i32
    %c0_i32_0 = arith.constant 0 : i32
    return %arg0, %c0_i32, %arg3 : i32, i32, i32
  }
  func.func @transform_3(%arg0: i32, %arg1: i32, %arg2: i32, %arg3: i32) -> (i32, i32, i32, i32) {
    %c0_i32 = arith.constant 0 : i32
    return %arg0, %arg1, %arg2, %arg3 : i32, i32, i32, i32
  }
}

</mosaic_0001>

<llo_original>
// kernel: tpu_custom_call.1
$region0: #{tpu_custom_call.1}
  #allocation0 [shape = 'u32[]', space=smem, size = 0x4, offset = 0x4, fixed_abs, tag = 'smem constant byte address 0x4 - core index']
  #allocation1 [shape = 'u32[144,128]{1,0:T(1,128)}', space=vmem, size = 0x12000, scoped, tag = 'internal scratch']
  %s0 = inlined_call_operand.hbm [shape: bf16[2,8,32], index: 0, kind: input, shape index: {}]
  %s1 = inlined_call_operand.hbm [shape: bf16[3,32,32], index: 1, kind: input, shape index: {}]
  %s2 = inlined_call_operand.vmem [shape: f32[3,1,32], index: 2, kind: input, shape index: {}]
  %s3 = inlined_call_operand.hbm [shape: bf16[3,2,8,32], index: 3, kind: output, shape index: {}]
  %s4 = sld [smem:[#allocation0]]
  $region53: #{tpu_custom_call.1} parent=0
    _
  %s6 = ssub.s32 1, %s4
  %s7 = scalar_select 0, %s6, %s4
  $region1: #{tpu_custom_call.1} parent=0
    #allocation2 [shape = 'u8[4096]{0}', space=vmem, size = 0x1000, scoped, tag = 'input window, operand 0']
    #allocation3 [shape = 's32[2]{0}', space=sflag, size = 0x8, scoped, tag = 'scoped memory for tpu_custom_call.1']
    #allocation4 [shape = 's32[2]{0}', space=sflag, size = 0x8, scoped, tag = 'scoped memory for tpu_custom_call.1']
    #allocation5 [shape = 'u8[16384]{0}', space=vmem, size = 0x4000, scoped, tag = 'input window, operand 1']
    #allocation6 [shape = 's32[2]{0}', space=sflag, size = 0x8, scoped, tag = 'scoped memory for tpu_custom_call.1']
    #allocation7 [shape = 'u8[4096]{0}', space=vmem, size = 0x1000, scoped, tag = 'output window, operand 0']
    %8 = vsyncpa [#allocation3], 0
    %s9 = scalar_lea.sflag [#allocation3], 1
    %10 = vsyncpa %s9, 0
    %11 = vsyncpa [#allocation6], 0
    %s12 = scalar_lea.sflag [#allocation6], 1
    %13 = vsyncpa %s12, 0
    %14 = vsyncpa [#allocation4], 0
    %s15 = scalar_lea.sflag [#allocation4], 1
    %16 = vsyncpa %s15, 0
    loop: start=0, step=1, limit=8
    $region2: #{tpu_custom_call.1} parent=1 // loop_pre_header
      _
    $region3: #{tpu_custom_call.1} parent=1 // loop_header
      %s18 = sphi 0, %s22
      %p19 = scmp.ge.s32.totalorder %s18, 8
      %s25 = sphi 0, %s51
      %s26 = sphi 0, %s47
      %s27 = sphi 0, %s43
      %s28 = sphi 0, %s39
      %s29 = sphi 0, %s25
      %s30 = sphi 0, %s26
      %s31 = sphi 0, %s27
      %s32 = sphi 0, %s28
      %s33 = sphi 0, %s29
      %s34 = sphi 0, %s30
      %s35 = sphi 0, %s31
      %s36 = sphi 0, %s32
      %s56 = sphi 0, %s58
      %s59 = sphi 0, %s56
      %s60 = sphi 0, %s59
      %s76 = sphi 0, %s60
      %s84 = sphi 0, %s86
      %s87 = sphi 0, %s84
      %s88 = sphi 0, %s87
      %s104 = sphi 0, %s88
      %s112 = sphi 0, %s114
      %s115 = sphi 0, %s112
      %s116 = sphi 0, %s115
      %s132 = sphi 0, %s116
      %s144 = sphi 0, %s146
      %s147 = sphi 0, %s144
      %s148 = sphi 0, %s147
      %s164 = sphi 0, %s148
    $region4: #{tpu_custom_call.1} parent=1 // loop_header_branch
      %21 = sbr.rel (%p19) target = $region8
    $region5: #{tpu_custom_call.1} parent=1 // loop_body
      %s23 = ssub.s32 %s18, 1
      %s24 = ssub.s32 %s18, 2
      %s37 = sadd.s32 1, %s28
      %p38 = scmp.ge.s32.totalorder %s37, 1
      %s39 = scalar_select %p38, 0, %s37
      %s40 = sadd.s32 1, %s27
      %s41 = scalar_select %p38, %s40, %s27
      %p42 = scmp.ge.s32.totalorder %s41, 1
      %s43 = scalar_select %p42, 0, %s41
      %s44 = sadd.s32 1, %s26
      %s45 = scalar_select %p42, %s44, %s26
      %p46 = scmp.ge.s32.totalorder %s45, 2
      %s47 = scalar_select %p46, 0, %s45
      %s48 = sadd.s32 1, %s25
      %s49 = scalar_select %p46, %s48, %s25
      %p50 = scmp.ge.s32.totalorder %s49, 3
      %s51 = scalar_select %p50, 0, %s49
      %s52 = ssub.s32 %s26, %s47
      %s53 = ssub.s32 %s27, %s43
      %s54 = sor.u32 %s52, %s53
      %p55 = scmp.eq.s32.totalorder %s54, 0
      %s57 = sadd.s32 %s56, 1
      %s58 = scalar_select %p55, %s56, %s57
      %p61 = pneg %p55
      %p62 = scmp.eq.s32.totalorder %s18, 5
      %p63 = por %p61, %p62
      %p64 = scmp.ne.s32.totalorder %s56, %s59
      %p65 = scmp.eq.s32.totalorder %s18, 0
      %p66 = por %p64, %p65
      %p67 = scmp.ne.s32.totalorder %s56, %s59
      %p68 = scmp.eq.s32.totalorder %s23, 5
      %p69 = por %p67, %p68
      %p70 = scmp.ne.s32.totalorder %s59, %s60
      %p71 = scmp.eq.s32.totalorder %s23, 0
      %p72 = por %p70, %p71
      %p73 = scmp.ne.s32.totalorder %s59, %s60
      %p74 = scmp.eq.s32.totalorder %s24, 5
      %p75 = por %p73, %p74
      %p77 = scmp.ne.s32.totalorder %s60, %s76
      %p78 = scmp.eq.s32.totalorder %s24, 0
      %p79 = por %p77, %p78
      %s80 = ssub.s32 %s25, %s51
      %s81 = ssub.s32 %s28, %s39
      %s82 = sor.u32 %s80, %s81
      %p83 = scmp.eq.s32.totalorder %s82, 0
      %s85 = sadd.s32 %s84, 1
      %s86 = scalar_select %p83, %s84, %s85
      %p89 = pneg %p83
      %p90 = scmp.eq.s32.totalorder %s18, 5
      %p91 = por %p89, %p90
      %p92 = scmp.ne.s32.totalorder %s84, %s87
      %p93 = scmp.eq.s32.totalorder %s18, 0
      %p94 = por %p92, %p93
      %p95 = scmp.ne.s32.totalorder %s84, %s87
      %p96 = scmp.eq.s32.totalorder %s23, 5
      %p97 = por %p95, %p96
      %p98 = scmp.ne.s32.totalorder %s87, %s88
      %p99 = scmp.eq.s32.totalorder %s23, 0
      %p100 = por %p98, %p99
      %p101 = scmp.ne.s32.totalorder %s87, %s88
      %p102 = scmp.eq.s32.totalorder %s24, 5
      %p103 = por %p101, %p102
      %p105 = scmp.ne.s32.totalorder %s88, %s104
      %p106 = scmp.eq.s32.totalorder %s24, 0
      %p107 = por %p105, %p106
      %s108 = ssub.s32 %s25, %s51
      %s109 = ssub.s32 %s28, %s39
      %s110 = sor.u32 %s108, %s109
      %p111 = scmp.eq.s32.totalorder %s110, 0
      %s113 = sadd.s32 %s112, 1
      %s114 = scalar_select %p111, %s112, %s113
      %p117 = pneg %p111
      %p118 = scmp.eq.s32.totalorder %s18, 5
      %p119 = por %p117, %p118
      %p120 = scmp.ne.s32.totalorder %s112, %s115
      %p121 = scmp.eq.s32.totalorder %s18, 0
      %p122 = por %p120, %p121
      %p123 = scmp.ne.s32.totalorder %s112, %s115
      %p124 = scmp.eq.s32.totalorder %s23, 5
      %p125 = por %p123, %p124
      %p126 = scmp.ne.s32.totalorder %s115, %s116
      %p127 = scmp.eq.s32.totalorder %s23, 0
      %p128 = por %p126, %p127
      %p129 = scmp.ne.s32.totalorder %s115, %s116
      %p130 = scmp.eq.s32.totalorder %s24, 5
      %p131 = por %p129, %p130
      %p133 = scmp.ne.s32.totalorder %s116, %s132
      %p134 = scmp.eq.s32.totalorder %s24, 0
      %p135 = por %p133, %p134
      %s136 = ssub.s32 %s25, %s51
      %s137 = ssub.s32 %s26, %s47
      %s138 = sor.u32 %s136, %s137
      %s139 = ssub.s32 %s27, %s43
      %s140 = sor.u32 %s138, %s139
      %s141 = ssub.s32 %s28, %s39
      %s142 = sor.u32 %s140, %s141
      %p143 = scmp.eq.s32.totalorder %s142, 0
      %s145 = sadd.s32 %s144, 1
      %s146 = scalar_select %p143, %s144, %s145
      %p149 = pneg %p143
      %p150 = scmp.eq.s32.totalorder %s18, 5
      %p151 = por %p149, %p150
      %p152 = scmp.ne.s32.totalorder %s144, %s147
      %p153 = scmp.eq.s32.totalorder %s18, 0
      %p154 = por %p152, %p153
      %p155 = scmp.ne.s32.totalorder %s144, %s147
      %p156 = scmp.eq.s32.totalorder %s23, 5
      %p157 = por %p155, %p156
      %p158 = scmp.ne.s32.totalorder %s147, %s148
      %p159 = scmp.eq.s32.totalorder %s23, 0
      %p160 = por %p158, %p159
      %p161 = scmp.ne.s32.totalorder %s147, %s148
      %p162 = scmp.eq.s32.totalorder %s24, 5
      %p163 = por %p161, %p162
      %p165 = scmp.ne.s32.totalorder %s148, %s164
      %p166 = scmp.eq.s32.totalorder %s24, 0
      %p167 = por %p165, %p166
      %p168 = scmp.le.s32.totalorder 1, %s18
      %p169 = scmp.lt.s32.totalorder %s18, 7
      %p170 = pnand %p168, %p169
      %p171 = pneg %p170
      // Predicated region
      $region9: #{tpu_custom_call.1} parent=5 // pred_check
        _
      $region10: #{tpu_custom_call.1} parent=5 // pred_check_branch
        %173 = sbr.rel (%p170) target = $region12
      $region11: #{tpu_custom_call.1} parent=5 // pred_region
        %s174 = ssub.s32 %s18, 1
      $region12: #{tpu_custom_call.1} parent=5 // pred_fallthru
        _
      %p175 = scmp.lt.s32.totalorder %s18, 6
      // Predicated region
      $region13: #{tpu_custom_call.1} parent=5 // pred_check
        %p176 = pneg %p175
      $region14: #{tpu_custom_call.1} parent=5 // pred_check_branch
        %178 = sbr.rel (%p176) target = $region16
      $region15: #{tpu_custom_call.1} parent=5 // pred_region
        // Predicated region
        $region17: #{tpu_custom_call.1} parent=15 // pred_check
          %p179 = pneg %p66
        $region18: #{tpu_custom_call.1} parent=15 // pred_check_branch
          %181 = sbr.rel (%p179) target = $region20
        $region19: #{tpu_custom_call.1} parent=15 // pred_region
          %s182 = sand.u32 %s56, 1
          %s183 = scalar_lea.sflag [#allocation3], %s182
          %s184 = sand.u32 %s56, 1
          %s185 = smul.addr %s184, 4
          %s186 = scalar_lea.vmem [#allocation2], %s185
          %s188 = ssub.s32 64, 64
          %189 = vsyncadd %s183, %s188
          %s190 = sadd.s32 %s27, %s26
          %s191 = smul.addr %s190, 64
          %s192 = scalar_lea.hbm %s0, %s191
          %s194 = sshll.u32 %s186, 4
          %s195 = int_to_ptr.vmem [resolvable:$true] %s194
          %197 = dma.hbm_to_vmem [thread:$0]  %s192, 64, %s195, %s183
        $region20: #{tpu_custom_call.1} parent=15 // pred_fallthru
          _
        // Predicated region
        $region21: #{tpu_custom_call.1} parent=15 // pred_check
          %p198 = pneg %p94
        $region22: #{tpu_custom_call.1} parent=15 // pred_check_branch
          %200 = sbr.rel (%p198) target = $region24
        $region23: #{tpu_custom_call.1} parent=15 // pred_region
          %s201 = sand.u32 %s84, 1
          %s202 = scalar_lea.sflag [#allocation6], %s201
          %s203 = sand.u32 %s84, 1
          %s204 = smul.addr %s203, 16
          %s205 = scalar_lea.vmem [#allocation5], %s204
          %s207 = ssub.s32 256, 256
          %208 = vsyncadd %s202, %s207
          %s209 = smul.addr %s25, 4
          %s210 = sadd.s32 %s28, %s209
          %s211 = smul.addr %s210, 64
          %s212 = scalar_lea.hbm %s1, %s211
          %s213 = sshll.u32 %s205, 4
          %s214 = int_to_ptr.vmem [resolvable:$true] %s213
          %219 = dma.hbm_to_vmem [thread:$0]  %s212, 256, %s214, %s202, 64, 64, 4
        $region24: #{tpu_custom_call.1} parent=15 // pred_fallthru
          _
        // Predicated region
        $region25: #{tpu_custom_call.1} parent=15 // pred_check
          %p220 = pneg %p122
        $region26: #{tpu_custom_call.1} parent=15 // pred_check_branch
          %222 = sbr.rel (%p220) target = $region28
        $region27: #{tpu_custom_call.1} parent=15 // pred_region
          %p223 = scmp.lt.s32.totalorder %s25, 2
          %s224 = scalar_select %p223, %s25, 2
          %p225 = scmp.lt.s32.totalorder %s28, 0
          %s226 = scalar_select %p225, %s28, 0
          %s227 = sadd.s32 %s226, %s224
          %s228 = scalar_lea.vmem %s2, %s227
        $region28: #{tpu_custom_call.1} parent=15 // pred_fallthru
          _
      $region16: #{tpu_custom_call.1} parent=5 // pred_fallthru
        _
      %p229 = scmp.le.s32.totalorder 1, %s18
      %p230 = scmp.lt.s32.totalorder %s18, 7
      %p231 = pnand %p229, %p230
      %p232 = pneg %p231
      // Predicated region
      $region29: #{tpu_custom_call.1} parent=5 // pred_check
        _
      $region30: #{tpu_custom_call.1} parent=5 // pred_check_branch
        %234 = sbr.rel (%p231) target = $region32
      $region31: #{tpu_custom_call.1} parent=5 // pred_region
        %s235 = ssub.s32 %s18, 1
        %s236 = sand.u32 %s59, 1
        %s237 = scalar_lea.sflag [#allocation3], %s236
        %s238 = sand.u32 %s59, 1
        %s239 = smul.addr %s238, 4
        %s240 = scalar_lea.vmem [#allocation2], %s239
        // Predicated region
        $region33: #{tpu_custom_call.1} parent=31 // pred_check
          %p241 = pneg %p72
        $region34: #{tpu_custom_call.1} parent=31 // pred_check_branch
          %243 = sbr.rel (%p241) target = $region36
        $region35: #{tpu_custom_call.1} parent=31 // pred_region
          %244 = dma.done %s237, 64
        $region36: #{tpu_custom_call.1} parent=31 // pred_fallthru
          _
        %s245 = sand.u32 %s87, 1
        %s246 = scalar_lea.sflag [#allocation6], %s245
        %s247 = sand.u32 %s87, 1
        %s248 = smul.addr %s247, 16
        %s249 = scalar_lea.vmem [#allocation5], %s248
        // Predicated region
        $region37: #{tpu_custom_call.1} parent=31 // pred_check
          %p250 = pneg %p100
        $region38: #{tpu_custom_call.1} parent=31 // pred_check_branch
          %252 = sbr.rel (%p250) target = $region40
        $region39: #{tpu_custom_call.1} parent=31 // pred_region
          %253 = dma.done %s246, 256
        $region40: #{tpu_custom_call.1} parent=31 // pred_fallthru
          _
        %s254 = sand.u32 %s59, 1
        %s255 = scalar_lea.sflag [#allocation3], %s254
        %s256 = sand.u32 %s59, 1
        %s257 = smul.addr %s256, 4
        %s258 = scalar_lea.vmem [#allocation2], %s257
        %p259 = pneg %p72
        %p260 = pneg %p69
        %s261 = sand.u32 %s87, 1
        %s262 = scalar_lea.sflag [#allocation6], %s261
        %s263 = sand.u32 %s87, 1
        %s264 = smul.addr %s263, 16
        %s265 = scalar_lea.vmem [#allocation5], %s264
        %p266 = pneg %p100
        %p267 = pneg %p97
        %p268 = scmp.lt.s32.totalorder %s29, 2
        %s269 = scalar_select %p268, %s29, 2
        %p270 = scmp.lt.s32.totalorder %s32, 0
        %s271 = scalar_select %p270, %s32, 0
        %s272 = sadd.s32 %s271, %s269
        %s273 = scalar_lea.vmem %s2, %s272
        %p274 = pneg %p128
        %p275 = pneg %p125
        %p276 = pneg %p160
        %p277 = pneg %p157
        %s278 = sand.u32 %s147, 1
        %s279 = scalar_lea.sflag [#allocation4], %s278
        %s280 = sand.u32 %s147, 1
        %s281 = smul.addr %s280, 4
        %s282 = scalar_lea.vmem [#allocation7], %s281
        %p283 = scmp.lt.s32.totalorder %s29, 2
        %s284 = scalar_select %p283, %s29, 2
        %p285 = scmp.lt.s32.totalorder %s32, 0
        %s286 = scalar_select %p285, %s32, 0
        %s287 = sadd.s32 %s286, %s284
        %s288 = scalar_lea.vmem %s2, %s287
        %v290 = vld [vmem:[%s240] sm:$0xf]
        %v291 = vld [vmem:[%s249] sm:$0xf]
        %v292 = vld [vmem:[%s249 + $0x4] sm:$0xf]
        %v293 = vld [vmem:[%s249 + $0x8] sm:$0xf]
        %v294 = vld [vmem:[%s249 + $0xc] sm:$0xf]
        %v295 = vld [vmem:[%s288] sm:$0x1]
        %v297 = vlaneseq
        %v298 = vshrl.u32 %v297, 7
        %v299 = vsub.s32 0, %v298
        %v300 = vrot.slane %v295, %v299
        %v306 = vunpack.c.l.b16 %v291
        %v307 = vunpack.c.l.b16 %v292
        %v308 = vunpack.c.l.b16 %v293
        %v309 = vunpack.c.l.b16 %v294
        %v310 = vpack.c.b16 %v307, %v306
        %v311 = vpack.c.b16 %v309, %v308
        %vm314 = vcmask 261120
        %v316 = vsel %vm314, %v290, 0
        %318 = vmatprep.subr.bf16.mxu0 0
        %319 = vmatpush1.bf16.msra.mxu0 %v310
        %320 = vmatprep.subr.bf16.mxu0 0
        %321 = vmatpush1.bf16.msra.mxu0 %v311
        %322 = vmatprep.subr.bf16.mxu0 0
        %323 = vmatpush1.bf16.msra.mxu0 0
        %324 = vmatprep.subr.bf16.mxu0 0
        %325 = vmatpush1.bf16.msra.mxu0 0
        %326 = vmatprep.subr.bf16.mxu0 0
        %327 = vmatpush1.bf16.msra.mxu0 0
        %328 = vmatprep.subr.bf16.mxu0 0
        %329 = vmatpush1.bf16.msra.mxu0 0
        %330 = vmatprep.subr.bf16.mxu0 0
        %331 = vmatpush1.bf16.msra.mxu0 0
        %332 = vmatprep.subr.bf16.mxu0 0
        %333 = vmatpush1.bf16.msra.mxu0 0
        %334 = vmatprep.subr.bf16.mxu0 0
        %335 = vmatpush1.bf16.msra.mxu0 0
        %336 = vmatprep.subr.bf16.mxu0 0
        %337 = vmatpush1.bf16.msra.mxu0 0
        %338 = vmatprep.subr.bf16.mxu0 0
        %339 = vmatpush1.bf16.msra.mxu0 0
        %340 = vmatprep.subr.bf16.mxu0 0
        %341 = vmatpush1.bf16.msra.mxu0 0
        %342 = vmatprep.subr.bf16.mxu0 0
        %343 = vmatpush1.bf16.msra.mxu0 0
        %344 = vmatprep.subr.bf16.mxu0 0
        %345 = vmatpush1.bf16.msra.mxu0 0
        %346 = vmatprep.subr.bf16.mxu0 0
        %347 = vmatpush1.bf16.msra.mxu0 0
        %348 = vmatprep.subr.bf16.mxu0 0
        %349 = vmatpush1.bf16.msra.mxu0 0
        %350 = vmatprep.mubr.bf16.mxu0 0
        %351 = vmatmul.mubr.bf16.gmra.mrb[0].mxu0 %v316
        %v352 = vpop.f32.mrb[0].mxu0
        %v353 = vadd.f32 %v300, %v352
        %v354 = vpop.f32.mrb[0].mxu0
        %v355 = vpop.f32.mrb[0].mxu0
        %v356 = vpop.f32.mrb[0].mxu0
        %357 = vdwg.mxu0
        %v358 = vpack.c.bf16 %v353, %v353
        %vm359 = vcmask 257024
        %360 = vst.msk [vmem:[%s282] sm:$0xf] %vm359, %v358
        %s361 = sand.u32 %s147, 1
        %s362 = scalar_lea.sflag [#allocation4], %s361
        %s363 = sand.u32 %s147, 1
        %s364 = smul.addr %s363, 4
        %s365 = scalar_lea.vmem [#allocation7], %s364
        // Predicated region
        $region41: #{tpu_custom_call.1} parent=31 // pred_check
          %p366 = pneg %p157
        $region42: #{tpu_custom_call.1} parent=31 // pred_check_branch
          %368 = sbr.rel (%p366) target = $region44
        $region43: #{tpu_custom_call.1} parent=31 // pred_region
          %s370 = ssub.s32 64, 64
          %371 = vsyncadd %s362, %s370
          %s372 = sadd.s32 %s32, %s31
          %s373 = sadd.s32 %s372, %s30
          %s374 = smul.addr %s29, 2
          %s375 = sadd.s32 %s373, %s374
          %s376 = smul.addr %s375, 64
          %s377 = scalar_lea.hbm %s3, %s376
          %s379 = sshll.u32 %s365, 4
          %s380 = int_to_ptr.vmem [resolvable:$true] %s379
          %382 = dma.vmem_to_hbm [thread:$0]  %s380, 64, %s377, %s362
        $region44: #{tpu_custom_call.1} parent=31 // pred_fallthru
          _
      $region32: #{tpu_custom_call.1} parent=5 // pred_fallthru
        _
      %p383 = scmp.le.s32.totalorder 2, %s18
      // Predicated region
      $region45: #{tpu_custom_call.1} parent=5 // pred_check
        %p384 = pneg %p383
      $region46: #{tpu_custom_call.1} parent=5 // pred_check_branch
        %386 = sbr.rel (%p384) target = $region48
      $region47: #{tpu_custom_call.1} parent=5 // pred_region
        %s387 = ssub.s32 %s18, 2
        // Predicated region
        $region49: #{tpu_custom_call.1} parent=47 // pred_check
          %p388 = pneg %p163
        $region50: #{tpu_custom_call.1} parent=47 // pred_check_branch
          %390 = sbr.rel (%p388) target = $region52
        $region51: #{tpu_custom_call.1} parent=47 // pred_region
          %s391 = sand.u32 %s148, 1
          %s392 = scalar_lea.sflag [#allocation4], %s391
          %s393 = sand.u32 %s148, 1
          %s394 = smul.addr %s393, 4
          %s395 = scalar_lea.vmem [#allocation7], %s394
          %396 = dma.done %s392, 64
        $region52: #{tpu_custom_call.1} parent=47 // pred_fallthru
          _
      $region48: #{tpu_custom_call.1} parent=5 // pred_fallthru
        _
    $region6: #{tpu_custom_call.1} parent=1 // loop_footer
      %s22 = sadd.s32 1, %s18
    $region7: #{tpu_custom_call.1} parent=1 // loop_footer_branch
      %17 = sbr.rel target = $region3
    $region8: #{tpu_custom_call.1} parent=1 // loop_exit
      _
    %397 = vsyncpa [#allocation3], 1
    %s398 = scalar_lea.sflag [#allocation3], 1
    %399 = vsyncpa %s398, 1
    %400 = vsyncpa [#allocation6], 1
    %s401 = scalar_lea.sflag [#allocation6], 1
    %402 = vsyncpa %s401, 1
    %403 = vsyncpa [#allocation4], 1
    %s404 = scalar_lea.sflag [#allocation4], 1
    %405 = vsyncpa %s404, 1

</llo_original>
